<compile_context>
chip_gen: v7x
topology: tpu7x:2x2x1
jax: 0.10.0
libtpu: 0.0.40
codegen_flags: <defaults>
</compile_context>

<pallas_src>
import jax
import jax.numpy as jnp
from jax.experimental import pallas as pl
from jax.experimental.pallas import tpu as pltpu


def _round_up(n, m):
    return ((n + m - 1) // m) * m


def dnn_kernel(x_ref, w1t_ref, b1_ref, w2t_ref, b2_ref, y_out_ref, x_out_ref):
    """Fused 2-layer MLP for one batch tile: matmul + bias + ReLU, twice."""
    x = x_ref[...]                                        # (TB, G_in)

    # Layer 1: y = relu(x @ W1^T + b1); W1^T pre-transposed -> (G_in, H).
    # f32 accumulation; bias/ReLU epilogue in f32 (VPU-friendly on v5e too).
    h1 = jnp.dot(x, w1t_ref[...], preferred_element_type=jnp.float32)
    y = jnp.maximum(h1 + b1_ref[...], 0.0)                # (TB, H) f32
    y_out_ref[...] = y.astype(y_out_ref.dtype)

    # Layer 2: out = relu(y @ W2^T + b2); cast y to the weight dtype so the
    # MXU runs its native (bf16) path when the bf16 variant is selected.
    h2 = jnp.dot(y.astype(w2t_ref.dtype), w2t_ref[...],
                 preferred_element_type=jnp.float32)
    x_out_ref[...] = jnp.maximum(h2 + b2_ref[...], 0.0).astype(x_out_ref.dtype)


def dnn_forward(x, W1, b1, W2, b2, *, batch_tile=2048, use_bf16=False):
    """Mirrors dnn.forward: returns (x_out, y, W1, W2, b1, b2).

    x:  (B, G_in)
    W1: (H, G_in), b1: (H,)     -- torch nn.Linear layout
    W2: (G_in, H), b2: (G_in,)
    """
    B, G_in = x.shape
    H = W1.shape[0]
    out_dtype = x.dtype

    # Pre-transpose weights once (wrapper side) so the MXU consumes the
    # contraction directly — no transpose inside the kernel.
    W1t = W1.T                                  # (G_in, H)
    W2t = W2.T                                  # (H, G_in)
    b1_2d = b1.reshape(1, H).astype(jnp.float32)
    b2_2d = b2.reshape(1, G_in).astype(jnp.float32)

    if use_bf16:
        # Halves HBM read traffic and resident-weight VMEM; v6e/v7x MXUs are
        # native bf16. Accumulation stays f32 (preferred_element_type), so
        # only the strict 1e-5 check would need loosening.
        x_in = x.astype(jnp.bfloat16)
        W1t = W1t.astype(jnp.bfloat16)
        W2t = W2t.astype(jnp.bfloat16)
    else:
        x_in = x

    # --- Batch tiling. No jnp.pad: Pallas handles the ragged final block.
    if B < 16:
        TB = B                                  # single full-array block
    else:
        TB = min(batch_tile, _round_up(B, 8))
        # Guarantee >= 2 grid steps so "parallel" shards over v7x's 2 TCs.
        TB = min(TB, _round_up(-(-B // 2), 8))
        TB = max(8, (TB // 8) * 8)
    grid = (pl.cdiv(B, TB),)

    itemsize_in = jnp.dtype(x_in.dtype).itemsize
    itemsize_w = jnp.dtype(W1t.dtype).itemsize
    itemsize_out = jnp.dtype(out_dtype).itemsize
    flops = 4 * B * G_in * H                    # two matmuls, 2*M*N*K each
    bytes_accessed = (
        B * G_in * itemsize_in
        + G_in * H * itemsize_w + H * G_in * itemsize_w
        + 4 * (H + G_in)
        + B * H * itemsize_out + B * G_in * itemsize_out
    )

    y_out, x_out = pl.pallas_call(
        dnn_kernel,
        out_shape=(
            jax.ShapeDtypeStruct((B, H), out_dtype),      # y
            jax.ShapeDtypeStruct((B, G_in), out_dtype),   # x_out
        ),
        grid=grid,
        in_specs=[
            # Activations: one batch tile per grid step (pipelined).
            pl.BlockSpec((TB, G_in), lambda i: (i, 0)),
            # Weights / biases: constant-index whole-array blocks, resident
            # in VMEM across the whole grid.
            pl.BlockSpec((G_in, H), lambda i: (0, 0)),
            pl.BlockSpec((1, H), lambda i: (0, 0)),
            pl.BlockSpec((H, G_in), lambda i: (0, 0)),
            pl.BlockSpec((1, G_in), lambda i: (0, 0)),
        ],
        out_specs=(
            pl.BlockSpec((TB, H), lambda i: (i, 0)),
            pl.BlockSpec((TB, G_in), lambda i: (i, 0)),
        ),
        compiler_params=pltpu.CompilerParams(
            dimension_semantics=("parallel",),   # megacore sharding on v7x
        ),
        cost_estimate=pl.CostEstimate(
            flops=flops, transcendentals=0, bytes_accessed=bytes_accessed),
    )(x_in, W1t, b1_2d, W2t, b2_2d)

    return (x_out, y_out, W1, W2, b1, b2)


def xavier_uniform(key, shape, dtype=jnp.float32):
    """Deterministic xavier_uniform init (matches torch semantics for 2D)."""
    fan_out, fan_in = shape
    limit = jnp.sqrt(6.0 / (fan_in + fan_out))
    return jax.random.uniform(key, shape, dtype, minval=-limit, maxval=limit)


if __name__ == "__main__":
    # Small shapes consistent with the module: batch=8, G_in=16, hidden w1=32.
    B, G_IN, W1_HID = 8, 16, 32

    key = jax.random.PRNGKey(0)
    k_x, k_w1, k_b1, k_w2, k_b2 = jax.random.split(key, 5)

    x = jax.random.normal(k_x, (B, G_IN), dtype=jnp.float32)

    # Parameters (nn.Linear shapes: weight (out, in), bias (out,)).
    W1 = xavier_uniform(k_w1, (W1_HID, G_IN))
    b1 = jax.random.uniform(k_b1, (W1_HID,), minval=-0.1, maxval=0.1)
    W2 = xavier_uniform(k_w2, (G_IN, W1_HID))
    b2 = jax.random.uniform(k_b2, (G_IN,), minval=-0.1, maxval=0.1)

    outs = dnn_forward(x, W1, b1, W2, b2)
    outs = jax.block_until_ready(outs)
    x_out, y_out, ww1, ww2, bb1, bb2 = outs

    # Pure-JAX reference check (f32 path -> strict tolerances valid).
    y_ref = jnp.maximum(x @ W1.T + b1, 0.0)
    x_ref = jnp.maximum(y_ref @ W2.T + b2, 0.0)
    assert jnp.allclose(y_out, y_ref, atol=1e-5, rtol=1e-5)
    assert jnp.allclose(x_out, x_ref, atol=1e-5, rtol=1e-5)
    assert x_out.shape == (B, G_IN) and y_out.shape == (B, W1_HID)
    assert ww1.shape == (W1_HID, G_IN) and ww2.shape == (G_IN, W1_HID)
    assert bb1.shape == (W1_HID,) and bb2.shape == (G_IN,)

    print("KERNEL_OK")
</pallas_src>

<mosaic_0001>
module attributes {stable_mosaic.version = 11 : i64} {
  func.func @dnn_kernel(%arg0: i32, %arg1: memref<8x16xf32, #tpu.memory_space<vmem>>, %arg2: memref<16x32xf32, #tpu.memory_space<vmem>>, %arg3: memref<1x32xf32, #tpu.memory_space<vmem>>, %arg4: memref<32x16xf32, #tpu.memory_space<vmem>>, %arg5: memref<1x16xf32, #tpu.memory_space<vmem>>, %arg6: memref<8x32xf32, #tpu.memory_space<vmem>>, %arg7: memref<8x16xf32, #tpu.memory_space<vmem>>) attributes {dimension_semantics = [#tpu.dimension_semantics<parallel>], iteration_bounds = array<i64: 1>, scalar_prefetch = 0 : i64, scratch_operands = 0 : i64, tpu.core_type = #tpu.core_type<tc>, window_params = [{transform_indices = @transform_0, window_bounds = array<i64: 8, 16>}, {pipeline_mode = #tpu.pipeline_mode<synchronous>, transform_indices = @transform_1, window_bounds = array<i64: 16, 32>}, {pipeline_mode = #tpu.pipeline_mode<synchronous>, transform_indices = @transform_2, window_bounds = array<i64: 1, 32>}, {pipeline_mode = #tpu.pipeline_mode<synchronous>, transform_indices = @transform_3, window_bounds = array<i64: 32, 16>}, {pipeline_mode = #tpu.pipeline_mode<synchronous>, transform_indices = @transform_4, window_bounds = array<i64: 1, 16>}, {transform_indices = @transform_5, window_bounds = array<i64: 8, 32>}, {transform_indices = @transform_6, window_bounds = array<i64: 8, 16>}]} {
    %c0 = arith.constant 0 : index
    %c0_0 = arith.constant 0 : index
    %0 = vector.load %arg1[%c0, %c0_0] : memref<8x16xf32, #tpu.memory_space<vmem>>, vector<8x16xf32>
    %c0_1 = arith.constant 0 : index
    %c0_2 = arith.constant 0 : index
    %1 = vector.load %arg2[%c0_1, %c0_2] : memref<16x32xf32, #tpu.memory_space<vmem>>, vector<16x32xf32>
    %cst = arith.constant dense<0.000000e+00> : vector<8x32xf32>
    %2 = tpu.matmul %0, %1, %cst {dimension_numbers = #tpu.dot_dimension_numbers<[1], [0], [0], [1], [0, 0, 1, 1], [], []>} : vector<8x16xf32>, vector<16x32xf32>, vector<8x32xf32> -> vector<8x32xf32>
    %c0_3 = arith.constant 0 : index
    %c0_4 = arith.constant 0 : index
    %3 = vector.load %arg3[%c0_3, %c0_4] : memref<1x32xf32, #tpu.memory_space<vmem>>, vector<1x32xf32>
    %4 = vector.broadcast %3 : vector<1x32xf32> to vector<8x32xf32>
    %5 = arith.addf %2, %4 : vector<8x32xf32>
    %cst_5 = arith.constant 0.000000e+00 : f32
    %6 = vector.broadcast %cst_5 : f32 to vector<8x32xf32>
    %7 = arith.maximumf %5, %6 : vector<8x32xf32>
    %c0_6 = arith.constant 0 : index
    %c0_7 = arith.constant 0 : index
    %8 = vector.load %arg6[%c0_6, %c0_7] : memref<8x32xf32, #tpu.memory_space<vmem>>, vector<8x32xf32>
    tpu.vector_store %arg6[%c0_6, %c0_7], %7 {strides = array<i32>} : memref<8x32xf32, #tpu.memory_space<vmem>>, vector<8x32xf32>,
    %c0_8 = arith.constant 0 : index
    %c0_9 = arith.constant 0 : index
    %9 = vector.load %arg4[%c0_8, %c0_9] : memref<32x16xf32, #tpu.memory_space<vmem>>, vector<32x16xf32>
    %cst_10 = arith.constant dense<0.000000e+00> : vector<8x16xf32>
    %10 = tpu.matmul %7, %9, %cst_10 {dimension_numbers = #tpu.dot_dimension_numbers<[1], [0], [0], [1], [0, 0, 1, 1], [], []>} : vector<8x32xf32>, vector<32x16xf32>, vector<8x16xf32> -> vector<8x16xf32>
    %c0_11 = arith.constant 0 : index
    %c0_12 = arith.constant 0 : index
    %11 = vector.load %arg5[%c0_11, %c0_12] : memref<1x16xf32, #tpu.memory_space<vmem>>, vector<1x16xf32>
    %12 = vector.broadcast %11 : vector<1x16xf32> to vector<8x16xf32>
    %13 = arith.addf %10, %12 : vector<8x16xf32>
    %cst_13 = arith.constant 0.000000e+00 : f32
    %14 = vector.broadcast %cst_13 : f32 to vector<8x16xf32>
    %15 = arith.maximumf %13, %14 : vector<8x16xf32>
    %c0_14 = arith.constant 0 : index
    %c0_15 = arith.constant 0 : index
    %16 = vector.load %arg7[%c0_14, %c0_15] : memref<8x16xf32, #tpu.memory_space<vmem>>, vector<8x16xf32>
    tpu.vector_store %arg7[%c0_14, %c0_15], %15 {strides = array<i32>} : memref<8x16xf32, #tpu.memory_space<vmem>>, vector<8x16xf32>,
    return
  }
  func.func @transform_0(%arg0: i32) -> (i32, i32) {
    %c0_i32 = arith.constant 0 : i32
    %c0_i32_0 = arith.constant 0 : i32
    return %arg0, %c0_i32 : i32, i32
  }
  func.func @transform_1(%arg0: i32) -> (i32, i32) {
    %c0_i32 = arith.constant 0 : i32
    %c0_i32_0 = arith.constant 0 : i32
    %c0_i32_1 = arith.constant 0 : i32
    return %c0_i32, %c0_i32_0 : i32, i32
  }
  func.func @transform_2(%arg0: i32) -> (i32, i32) {
    %c0_i32 = arith.constant 0 : i32
    %c0_i32_0 = arith.constant 0 : i32
    %c0_i32_1 = arith.constant 0 : i32
    return %c0_i32, %c0_i32_0 : i32, i32
  }
  func.func @transform_3(%arg0: i32) -> (i32, i32) {
    %c0_i32 = arith.constant 0 : i32
    %c0_i32_0 = arith.constant 0 : i32
    %c0_i32_1 = arith.constant 0 : i32
    return %c0_i32, %c0_i32_0 : i32, i32
  }
  func.func @transform_4(%arg0: i32) -> (i32, i32) {
    %c0_i32 = arith.constant 0 : i32
    %c0_i32_0 = arith.constant 0 : i32
    %c0_i32_1 = arith.constant 0 : i32
    return %c0_i32, %c0_i32_0 : i32, i32
  }
  func.func @transform_5(%arg0: i32) -> (i32, i32) {
    %c0_i32 = arith.constant 0 : i32
    %c0_i32_0 = arith.constant 0 : i32
    return %arg0, %c0_i32 : i32, i32
  }
  func.func @transform_6(%arg0: i32) -> (i32, i32) {
    %c0_i32 = arith.constant 0 : i32
    %c0_i32_0 = arith.constant 0 : i32
    return %arg0, %c0_i32 : i32, i32
  }
}

</mosaic_0001>

<llo_original>
// kernel: tpu_custom_call.1
$region0: #{tpu_custom_call.1}
  #allocation0 [shape = 'u32[]', space=smem, size = 0x4, offset = 0x4, fixed_abs, tag = 'smem constant byte address 0x4 - core index']
  #allocation1 [shape = 'u32[144,128]{1,0:T(1,128)}', space=vmem, size = 0x12000, scoped, tag = 'internal scratch']
  %s0 = inlined_call_operand.vmem [shape: f32[8,16], index: 0, kind: input, shape index: {}]
  %s1 = inlined_call_operand.vmem [shape: f32[16,32], index: 1, kind: input, shape index: {}]
  %s2 = inlined_call_operand.vmem [shape: f32[1,32], index: 2, kind: input, shape index: {}]
  %s3 = inlined_call_operand.vmem [shape: f32[32,16], index: 3, kind: input, shape index: {}]
  %s4 = inlined_call_operand.vmem [shape: f32[1,16], index: 4, kind: input, shape index: {}]
  %s5 = inlined_call_operand.hbm [shape: f32[8,32], index: 5, kind: output, shape index: {0}]
  %s6 = inlined_call_operand.hbm [shape: f32[8,16], index: 6, kind: output, shape index: {1}]
  %7 = xla_tuple %s5, %s6
  %s8 = sld [smem:[#allocation0]]
  $region38: #{tpu_custom_call.1} parent=0
    _
  %s10 = ssub.s32 1, %s8
  %s11 = scalar_select 0, %s10, %s8
  $region1: #{tpu_custom_call.1} parent=0
    #allocation2 [shape = 'u8[4096]{0}', space=vmem, size = 0x1000, scoped, tag = 'output window, operand 0, single buffered']
    #allocation3 [shape = 's32[1]{0}', space=sflag, size = 0x4, scoped, tag = 'scoped memory for tpu_custom_call.1']
    #allocation4 [shape = 'u8[4096]{0}', space=vmem, size = 0x1000, scoped, tag = 'output window, operand 1, single buffered']
    #allocation5 [shape = 's32[1]{0}', space=sflag, size = 0x4, scoped, tag = 'scoped memory for tpu_custom_call.1']
    %12 = vsyncpa [#allocation3], 0
    %13 = vsyncpa [#allocation5], 0
    // Predicated region
    $region2: #{tpu_custom_call.1} parent=1 // pred_check
      _
    $region3: #{tpu_custom_call.1} parent=1 // pred_check_branch
      %15 = sbr.rel (0) target = $region5
    $region4: #{tpu_custom_call.1} parent=1 // pred_region
      _
    $region5: #{tpu_custom_call.1} parent=1 // pred_fallthru
      _
    // Predicated region
    $region6: #{tpu_custom_call.1} parent=1 // pred_check
      _
    $region7: #{tpu_custom_call.1} parent=1 // pred_check_branch
      %17 = sbr.rel (0) target = $region9
    $region8: #{tpu_custom_call.1} parent=1 // pred_region
      _
    $region9: #{tpu_custom_call.1} parent=1 // pred_fallthru
      _
    // Predicated region
    $region10: #{tpu_custom_call.1} parent=1 // pred_check
      _
    $region11: #{tpu_custom_call.1} parent=1 // pred_check_branch
      %19 = sbr.rel (0) target = $region13
    $region12: #{tpu_custom_call.1} parent=1 // pred_region
      _
    $region13: #{tpu_custom_call.1} parent=1 // pred_fallthru
      _
    // Predicated region
    $region14: #{tpu_custom_call.1} parent=1 // pred_check
      _
    $region15: #{tpu_custom_call.1} parent=1 // pred_check_branch
      %21 = sbr.rel (0) target = $region17
    $region16: #{tpu_custom_call.1} parent=1 // pred_region
      _
    $region17: #{tpu_custom_call.1} parent=1 // pred_fallthru
      _
    // Predicated region
    $region18: #{tpu_custom_call.1} parent=1 // pred_check
      _
    $region19: #{tpu_custom_call.1} parent=1 // pred_check_branch
      %23 = sbr.rel (0) target = $region21
    $region20: #{tpu_custom_call.1} parent=1 // pred_region
      _
    $region21: #{tpu_custom_call.1} parent=1 // pred_fallthru
      _
    %v24 = vld [vmem:[%s0] sm:$0xff]
    %v25 = vld [vmem:[%s1] sm:$0xff]
    %v26 = vld [vmem:[%s1 + $0x8] sm:$0xff]
    %v27 = vld [vmem:[%s2] sm:$0x1]
    %v29 = vlaneseq
    %v30 = vshrl.u32 %v29, 7
    %v31 = vsub.s32 0, %v30
    %v32 = vrot.slane %v27, %v31
    %vm34 = vcmask 130048
    %v36 = vsel %vm34, %v24, 0
    %38 = vmatprep.subr.mxu0 0.0
    %39 = vmatpush1.msra.mxu0 %v25
    %40 = vmatprep.subr.mxu0 0.0
    %41 = vmatpush1.msra.mxu0 %v26
    %42 = vmatprep.subr.mxu0 0.0
    %43 = vmatpush1.msra.mxu0 0.0
    %44 = vmatprep.subr.mxu0 0.0
    %45 = vmatpush1.msra.mxu0 0.0
    %46 = vmatprep.subr.mxu0 0.0
    %47 = vmatpush1.msra.mxu0 0.0
    %48 = vmatprep.subr.mxu0 0.0
    %49 = vmatpush1.msra.mxu0 0.0
    %50 = vmatprep.subr.mxu0 0.0
    %51 = vmatpush1.msra.mxu0 0.0
    %52 = vmatprep.subr.mxu0 0.0
    %53 = vmatpush1.msra.mxu0 0.0
    %54 = vmatprep.subr.mxu0 0.0
    %55 = vmatpush1.msra.mxu0 0.0
    %56 = vmatprep.subr.mxu0 0.0
    %57 = vmatpush1.msra.mxu0 0.0
    %58 = vmatprep.subr.mxu0 0.0
    %59 = vmatpush1.msra.mxu0 0.0
    %60 = vmatprep.subr.mxu0 0.0
    %61 = vmatpush1.msra.mxu0 0.0
    %62 = vmatprep.subr.mxu0 0.0
    %63 = vmatpush1.msra.mxu0 0.0
    %64 = vmatprep.subr.mxu0 0.0
    %65 = vmatpush1.msra.mxu0 0.0
    %66 = vmatprep.subr.mxu0 0.0
    %67 = vmatpush1.msra.mxu0 0.0
    %68 = vmatprep.subr.mxu0 0.0
    %69 = vmatpush1.msra.mxu0 0.0
    %70 = vmatprep.subr.mxu0 0.0
    %71 = vmatpush1.msra.mxu0 0.0
    %72 = vmatprep.subr.mxu0 0.0
    %73 = vmatpush1.msra.mxu0 0.0
    %74 = vmatprep.subr.mxu0 0.0
    %75 = vmatpush1.msra.mxu0 0.0
    %76 = vmatprep.subr.mxu0 0.0
    %77 = vmatpush1.msra.mxu0 0.0
    %78 = vmatprep.subr.mxu0 0.0
    %79 = vmatpush1.msra.mxu0 0.0
    %80 = vmatprep.subr.mxu0 0.0
    %81 = vmatpush1.msra.mxu0 0.0
    %82 = vmatprep.subr.mxu0 0.0
    %83 = vmatpush1.msra.mxu0 0.0
    %84 = vmatprep.subr.mxu0 0.0
    %85 = vmatpush1.msra.mxu0 0.0
    %86 = vmatprep.subr.mxu0 0.0
    %87 = vmatpush1.msra.mxu0 0.0
    %88 = vmatprep.subr.mxu0 0.0
    %89 = vmatpush1.msra.mxu0 0.0
    %90 = vmatprep.subr.mxu0 0.0
    %91 = vmatpush1.msra.mxu0 0.0
    %92 = vmatprep.subr.mxu0 0.0
    %93 = vmatpush1.msra.mxu0 0.0
    %94 = vmatprep.subr.mxu0 0.0
    %95 = vmatpush1.msra.mxu0 0.0
    %96 = vmatprep.subr.mxu0 0.0
    %97 = vmatpush1.msra.mxu0 0.0
    %98 = vmatprep.subr.mxu0 0.0
    %99 = vmatpush1.msra.mxu0 0.0
    %100 = vmatprep.subr.mxu0 0.0
    %101 = vmatpush1.msra.mxu0 0.0
    %102 = vmatprep.mubr.f32.mxu0 0.0
    %103 = vmatmul.mubr.f32.gmra.mrb[0].mxu0 %v36
    %v104 = vpop.f32.mrb[0].mxu0
    %v105 = vadd.f32 %v32, %v104
    %v106 = vpop.f32.mrb[0].mxu0
    %107 = vdwg.mxu0
    %v108 = vmax.f32 %v105, 0.0
    %vm109 = vcmask 261120
    %110 = vst.msk [vmem:[#allocation2] sm:$0xff] %vm109, %v108
    %v111 = vld [vmem:[%s3] sm:$0xff]
    %v112 = vld [vmem:[%s3 + $0x8] sm:$0xff]
    %v113 = vld [vmem:[%s3 + $0x10] sm:$0xff]
    %v114 = vld [vmem:[%s3 + $0x18] sm:$0xff]
    %v115 = vld [vmem:[%s4] sm:$0x1]
    %v117 = vlaneseq
    %v118 = vshrl.u32 %v117, 7
    %v119 = vsub.s32 0, %v118
    %v120 = vrot.slane %v115, %v119
    %v123 = vsel %vm109, %v108, 0
    %125 = vmatprep.subr.mxu0 0.0
    %126 = vmatpush1.msra.mxu0 %v111
    %127 = vmatprep.subr.mxu0 0.0
    %128 = vmatpush1.msra.mxu0 %v112
    %129 = vmatprep.subr.mxu0 0.0
    %130 = vmatpush1.msra.mxu0 %v113
    %131 = vmatprep.subr.mxu0 0.0
    %132 = vmatpush1.msra.mxu0 %v114
    %133 = vmatprep.subr.mxu0 0.0
    %134 = vmatpush1.msra.mxu0 0.0
    %135 = vmatprep.subr.mxu0 0.0
    %136 = vmatpush1.msra.mxu0 0.0
    %137 = vmatprep.subr.mxu0 0.0
    %138 = vmatpush1.msra.mxu0 0.0
    %139 = vmatprep.subr.mxu0 0.0
    %140 = vmatpush1.msra.mxu0 0.0
    %141 = vmatprep.subr.mxu0 0.0
    %142 = vmatpush1.msra.mxu0 0.0
    %143 = vmatprep.subr.mxu0 0.0
    %144 = vmatpush1.msra.mxu0 0.0
    %145 = vmatprep.subr.mxu0 0.0
    %146 = vmatpush1.msra.mxu0 0.0
    %147 = vmatprep.subr.mxu0 0.0
    %148 = vmatpush1.msra.mxu0 0.0
    %149 = vmatprep.subr.mxu0 0.0
    %150 = vmatpush1.msra.mxu0 0.0
    %151 = vmatprep.subr.mxu0 0.0
    %152 = vmatpush1.msra.mxu0 0.0
    %153 = vmatprep.subr.mxu0 0.0
    %154 = vmatpush1.msra.mxu0 0.0
    %155 = vmatprep.subr.mxu0 0.0
    %156 = vmatpush1.msra.mxu0 0.0
    %157 = vmatprep.subr.mxu0 0.0
    %158 = vmatpush1.msra.mxu0 0.0
    %159 = vmatprep.subr.mxu0 0.0
    %160 = vmatpush1.msra.mxu0 0.0
    %161 = vmatprep.subr.mxu0 0.0
    %162 = vmatpush1.msra.mxu0 0.0
    %163 = vmatprep.subr.mxu0 0.0
    %164 = vmatpush1.msra.mxu0 0.0
    %165 = vmatprep.subr.mxu0 0.0
    %166 = vmatpush1.msra.mxu0 0.0
    %167 = vmatprep.subr.mxu0 0.0
    %168 = vmatpush1.msra.mxu0 0.0
    %169 = vmatprep.subr.mxu0 0.0
    %170 = vmatpush1.msra.mxu0 0.0
    %171 = vmatprep.subr.mxu0 0.0
    %172 = vmatpush1.msra.mxu0 0.0
    %173 = vmatprep.subr.mxu0 0.0
    %174 = vmatpush1.msra.mxu0 0.0
    %175 = vmatprep.subr.mxu0 0.0
    %176 = vmatpush1.msra.mxu0 0.0
    %177 = vmatprep.subr.mxu0 0.0
    %178 = vmatpush1.msra.mxu0 0.0
    %179 = vmatprep.subr.mxu0 0.0
    %180 = vmatpush1.msra.mxu0 0.0
    %181 = vmatprep.subr.mxu0 0.0
    %182 = vmatpush1.msra.mxu0 0.0
    %183 = vmatprep.subr.mxu0 0.0
    %184 = vmatpush1.msra.mxu0 0.0
    %185 = vmatprep.subr.mxu0 0.0
    %186 = vmatpush1.msra.mxu0 0.0
    %187 = vmatprep.subr.mxu0 0.0
    %188 = vmatpush1.msra.mxu0 0.0
    %189 = vmatprep.mubr.f32.mxu0 0.0
    %190 = vmatmul.mubr.f32.gmra.mrb[0].mxu0 %v123
    %v191 = vpop.f32.mrb[0].mxu0
    %v192 = vadd.f32 %v120, %v191
    %v193 = vpop.f32.mrb[0].mxu0
    %194 = vdwg.mxu0
    %v195 = vmax.f32 %v192, 0.0
    %196 = vst.msk [vmem:[#allocation4] sm:$0xff] %vm34, %v195
    // Predicated region
    $region22: #{tpu_custom_call.1} parent=1 // pred_check
      _
    $region23: #{tpu_custom_call.1} parent=1 // pred_check_branch
      %198 = sbr.rel (0) target = $region25
    $region24: #{tpu_custom_call.1} parent=1 // pred_region
      %s200 = ssub.s32 128, 128
      %201 = vsyncadd [#allocation3], %s200
      %s203 = sshll.u32 [#allocation2], 4
      %s204 = int_to_ptr.vmem [resolvable:$true] %s203
      %206 = dma.vmem_to_hbm [thread:$0]  %s204, 128, %s5, [#allocation3]
    $region25: #{tpu_custom_call.1} parent=1 // pred_fallthru
      _
    // Predicated region
    $region26: #{tpu_custom_call.1} parent=1 // pred_check
      _
    $region27: #{tpu_custom_call.1} parent=1 // pred_check_branch
      %208 = sbr.rel (0) target = $region29
    $region28: #{tpu_custom_call.1} parent=1 // pred_region
      %s210 = ssub.s32 128, 128
      %211 = vsyncadd [#allocation5], %s210
      %s213 = sshll.u32 [#allocation4], 4
      %s214 = int_to_ptr.vmem [resolvable:$true] %s213
      %216 = dma.vmem_to_hbm [thread:$0]  %s214, 128, %s6, [#allocation5]
    $region29: #{tpu_custom_call.1} parent=1 // pred_fallthru
      _
    // Predicated region
    $region30: #{tpu_custom_call.1} parent=1 // pred_check
      _
    $region31: #{tpu_custom_call.1} parent=1 // pred_check_branch
      %218 = sbr.rel (0) target = $region33
    $region32: #{tpu_custom_call.1} parent=1 // pred_region
      %219 = dma.done [#allocation3], 128
    $region33: #{tpu_custom_call.1} parent=1 // pred_fallthru
      _
    // Predicated region
    $region34: #{tpu_custom_call.1} parent=1 // pred_check
      _
    $region35: #{tpu_custom_call.1} parent=1 // pred_check_branch
      %221 = sbr.rel (0) target = $region37
    $region36: #{tpu_custom_call.1} parent=1 // pred_region
      %222 = dma.done [#allocation5], 128
    $region37: #{tpu_custom_call.1} parent=1 // pred_fallthru
      _
    %223 = vsyncpa [#allocation3], 1
    %224 = vsyncpa [#allocation5], 1

</llo_original>
